<compile_context>
chip_gen: v7x
topology: tpu7x:2x2x1
jax: 0.10.0
libtpu: 0.0.40
codegen_flags: <defaults>
</compile_context>

<pallas_src>
import functools
import math

import jax
import jax.numpy as jnp
import numpy as np
from jax.experimental import pallas as pl
from jax.experimental.pallas import tpu as pltpu


# ----------------------------------------------------------------------------
# Parameter preprocessing (host, runs once): lower every conv (+ the nearest
# upsample preceding it) to a dense per-sample matrix + broadcast bias row.
# ----------------------------------------------------------------------------
def _nearest_src_index(out_size, in_size, scale):
    # PyTorch F.interpolate(mode='nearest'): src = min(floor(dst / scale), in-1)
    return np.minimum(
        np.floor(np.arange(out_size) / scale).astype(np.int64), in_size - 1)


def _conv_as_matrix(w, b, in_chw, *, stride, padding, up_scale=None):
    """Dense T, bias row and output (C,H,W) such that, for one sample x
    flattened in NCHW order, conv2d(upsample_nearest(x)) == x @ T + b_row."""
    w = np.asarray(w, dtype=np.float32)
    b = np.asarray(b, dtype=np.float32)
    cout, cin, kh_sz, kw_sz = w.shape
    cin_in, hin, win = in_chw
    assert cin_in == cin
    if up_scale is None:
        uh, uw = hin, win
        src_h = np.arange(uh)
        src_w = np.arange(uw)
    else:
        uh = int(math.floor(hin * up_scale))
        uw = int(math.floor(win * up_scale))
        src_h = _nearest_src_index(uh, hin, up_scale)
        src_w = _nearest_src_index(uw, win, up_scale)
    hout = (uh + 2 * padding - kh_sz) // stride + 1
    wout = (uw + 2 * padding - kw_sz) // stride + 1

    t = np.zeros((cin * hin * win, cout * hout * wout), dtype=np.float32)
    for co in range(cout):
        for oh in range(hout):
            for ow in range(wout):
                col = (co * hout + oh) * wout + ow
                for kh in range(kh_sz):
                    ih = oh * stride + kh - padding
                    if ih < 0 or ih >= uh:
                        continue                      # zero padding row
                    sh = src_h[ih]
                    for kw in range(kw_sz):
                        iw = ow * stride + kw - padding
                        if iw < 0 or iw >= uw:
                            continue                  # zero padding col
                        sw = src_w[iw]
                        for ci in range(cin):
                            row = (ci * hin + sh) * win + sw
                            t[row, col] += w[co, ci, kh, kw]
    b_row = np.repeat(b, hout * wout)[None, :].astype(np.float32)
    return t, b_row, (cout, hout, wout)


def build_fused_params(params, in_chw=(1, 16, 16)):
    """params: [(w, b)] * 4 in PyTorch OIHW layout. Returns (mats, out_chw)."""
    (w1, b1), (w2, b2), (w3, b3), (w4, b4) = params
    t1, r1, s1 = _conv_as_matrix(w1, b1, in_chw, stride=2, padding=1)
    t2, r2, s2 = _conv_as_matrix(w2, b2, s1, stride=2, padding=1)
    t3, r3, s3 = _conv_as_matrix(w3, b3, s2, stride=1, padding=1, up_scale=2.0)
    t4, r4, s4 = _conv_as_matrix(w4, b4, s3, stride=1, padding=1, up_scale=1.99)
    # Pad the final feature axis to a multiple of 128 so the kernel's output
    # store is lane-dense; the zero columns are cropped outside the kernel.
    f4 = t4.shape[1]
    f4p = max(128, ((f4 + 127) // 128) * 128)
    t4p = np.zeros((t4.shape[0], f4p), np.float32)
    t4p[:, :f4] = t4
    r4p = np.zeros((1, f4p), np.float32)
    r4p[:, :f4] = r4
    mats = tuple(jnp.asarray(a) for a in (t1, r1, t2, r2, t3, r3, t4p, r4p))
    return mats, s4


# ----------------------------------------------------------------------------
# The single fused Pallas kernel: 4 x (matmul + bias + relu), then tanh.
# ----------------------------------------------------------------------------
def _caep_fused_kernel(x_ref, t1_ref, r1_ref, t2_ref, r2_ref,
                       t3_ref, r3_ref, t4_ref, r4_ref, o_ref):
    def layer(h, t_ref, r_ref):
        acc = jnp.dot(h, t_ref[...], preferred_element_type=jnp.float32)
        return jnp.maximum(acc + r_ref[...], 0.0)

    h = x_ref[...]
    h = layer(h, t1_ref, r1_ref)   # relu(conv1)                  16 -> 8
    h = layer(h, t2_ref, r2_ref)   # relu(conv2)                   8 -> 4
    h = layer(h, t3_ref, r3_ref)   # relu(conv3 o upsample(x2))    4 -> 8 -> 8
    h = layer(h, t4_ref, r4_ref)   # relu(conv4 o upsample(x1.99)) 8 -> 15 -> 15
    o_ref[...] = jnp.tanh(h)       # final tanh


@functools.partial(jax.jit, static_argnames=("out_chw",))
def caep23l2_forward(x_nchw, mats, *, out_chw):
    """Forward pass of CAEP23L2. Input / output are NCHW (PyTorch layout)."""
    n, c_in, h_in, w_in = x_nchw.shape
    in_feat = c_in * h_in * w_in
    x2d = x_nchw.reshape(n, in_feat).astype(jnp.float32)

    out_feat_pad = mats[-1].shape[1]
    c_out, h_out, w_out = out_chw
    out_feat = c_out * h_out * w_out

    # Batch tiling: one block for small batches, 128-row parallel blocks once
    # the batch grows (keeps VMEM bounded on v7x and lets its 2 TCs split it).
    tb = n if n <= 128 else 128
    n_pad = ((n + tb - 1) // tb) * tb
    if n_pad != n:
        x2d = jnp.pad(x2d, ((0, n_pad - n), (0, 0)))

    x_spec = pl.BlockSpec((tb, in_feat), lambda i: (i, 0))
    const_specs = [pl.BlockSpec(m.shape, lambda i: (0, 0)) for m in mats]

    out = pl.pallas_call(
        _caep_fused_kernel,
        out_shape=jax.ShapeDtypeStruct((n_pad, out_feat_pad), jnp.float32),
        grid=(n_pad // tb,),
        in_specs=[x_spec] + const_specs,
        out_specs=pl.BlockSpec((tb, out_feat_pad), lambda i: (i, 0)),
        compiler_params=pltpu.CompilerParams(
            dimension_semantics=("parallel",)),
    )(x2d, *mats)

    return out[:n, :out_feat].reshape(n, c_out, h_out, w_out)


# ----------------------------------------------------------------------------
# Deterministic init matching the module: xavier_normal_ weights, PyTorch
# default uniform(-1/sqrt(fan_in), 1/sqrt(fan_in)) biases.
# ----------------------------------------------------------------------------
def init_params(key):
    cfgs = [(1, 2), (2, 4), (4, 2), (2, 1)]   # (Cin, Cout), all 3x3 kernels
    params = []
    for (cin, cout) in cfgs:
        key, kw_, kb_ = jax.random.split(key, 3)
        fan_in = cin * 9
        fan_out = cout * 9
        std = math.sqrt(2.0 / (fan_in + fan_out))  # xavier normal, gain=1
        w = std * jax.random.normal(kw_, (cout, cin, 3, 3), dtype=jnp.float32)
        bound = 1.0 / math.sqrt(fan_in)
        b = jax.random.uniform(kb_, (cout,), dtype=jnp.float32,
                               minval=-bound, maxval=bound)
        params.append((w, b))
    return params


# Pure-JAX reference (XLA convs) for a sanity check of the fused kernel.
def _reference_forward(x, params):
    def conv(x, w, b, stride, padding):
        y = jax.lax.conv_general_dilated(
            x, w, window_strides=(stride, stride),
            padding=((padding, padding), (padding, padding)),
            dimension_numbers=("NCHW", "OIHW", "NCHW"),
            precision=jax.lax.Precision.HIGHEST)
        return y + b[None, :, None, None]

    def upsample(x, s):
        h, w = x.shape[2], x.shape[3]
        oh, ow = int(math.floor(h * s)), int(math.floor(w * s))
        hs = jnp.minimum(jnp.floor(jnp.arange(oh) / s).astype(jnp.int32), h - 1)
        ws = jnp.minimum(jnp.floor(jnp.arange(ow) / s).astype(jnp.int32), w - 1)
        return x[:, :, hs][:, :, :, ws]

    (w1, b1), (w2, b2), (w3, b3), (w4, b4) = params
    x = jax.nn.relu(conv(x, w1, b1, 2, 1))
    x = jax.nn.relu(conv(x, w2, b2, 2, 1))
    x = upsample(x, 2.0)
    x = jax.nn.relu(conv(x, w3, b3, 1, 1))
    x = upsample(x, 1.99)
    x = jax.nn.relu(conv(x, w4, b4, 1, 1))
    return jnp.tanh(x)


if __name__ == "__main__":
    key = jax.random.PRNGKey(0)
    kx, kp = jax.random.split(key)
    # Module expects 1 input channel (conv1: in_channels=1).
    x = jax.random.normal(kx, (2, 1, 16, 16), dtype=jnp.float32)
    params = init_params(kp)

    mats, out_chw = build_fused_params(params, in_chw=(1, 16, 16))
    y = caep23l2_forward(x, mats, out_chw=out_chw)
    y = jax.block_until_ready(y)

    assert y.shape == (2, 1, 15, 15), y.shape   # 16 ->8 ->4 ->8 ->8 ->15 ->15
    assert y.dtype == jnp.float32

    # Sanity check against a pure-JAX/XLA reference of the same forward pass.
    y_ref = jax.block_until_ready(_reference_forward(x, params))
    max_err = float(jnp.max(jnp.abs(y - y_ref)))
    assert max_err < 3e-2, max_err

    print("KERNEL_OK")
</pallas_src>

<mosaic_0001>
module attributes {stable_mosaic.version = 11 : i64} {
  func.func @_caep_fused_kernel(%arg0: i32, %arg1: memref<2x256xf32, #tpu.memory_space<vmem>>, %arg2: memref<256x128xf32, #tpu.memory_space<vmem>>, %arg3: memref<1x128xf32, #tpu.memory_space<vmem>>, %arg4: memref<128x64xf32, #tpu.memory_space<vmem>>, %arg5: memref<1x64xf32, #tpu.memory_space<vmem>>, %arg6: memref<64x128xf32, #tpu.memory_space<vmem>>, %arg7: memref<1x128xf32, #tpu.memory_space<vmem>>, %arg8: memref<128x256xf32, #tpu.memory_space<vmem>>, %arg9: memref<1x256xf32, #tpu.memory_space<vmem>>, %arg10: memref<2x256xf32, #tpu.memory_space<vmem>>) attributes {dimension_semantics = [#tpu.dimension_semantics<parallel>], iteration_bounds = array<i64: 1>, scalar_prefetch = 0 : i64, scratch_operands = 0 : i64, tpu.core_type = #tpu.core_type<tc>, window_params = [{transform_indices = @transform_0, window_bounds = array<i64: 2, 256>}, {pipeline_mode = #tpu.pipeline_mode<synchronous>, transform_indices = @transform_1, window_bounds = array<i64: 256, 128>}, {pipeline_mode = #tpu.pipeline_mode<synchronous>, transform_indices = @transform_2, window_bounds = array<i64: 1, 128>}, {pipeline_mode = #tpu.pipeline_mode<synchronous>, transform_indices = @transform_3, window_bounds = array<i64: 128, 64>}, {pipeline_mode = #tpu.pipeline_mode<synchronous>, transform_indices = @transform_4, window_bounds = array<i64: 1, 64>}, {pipeline_mode = #tpu.pipeline_mode<synchronous>, transform_indices = @transform_5, window_bounds = array<i64: 64, 128>}, {pipeline_mode = #tpu.pipeline_mode<synchronous>, transform_indices = @transform_6, window_bounds = array<i64: 1, 128>}, {pipeline_mode = #tpu.pipeline_mode<synchronous>, transform_indices = @transform_7, window_bounds = array<i64: 128, 256>}, {pipeline_mode = #tpu.pipeline_mode<synchronous>, transform_indices = @transform_8, window_bounds = array<i64: 1, 256>}, {transform_indices = @transform_9, window_bounds = array<i64: 2, 256>}]} {
    %c0 = arith.constant 0 : index
    %c0_0 = arith.constant 0 : index
    %0 = vector.load %arg1[%c0, %c0_0] : memref<2x256xf32, #tpu.memory_space<vmem>>, vector<2x256xf32>
    %c0_1 = arith.constant 0 : index
    %c0_2 = arith.constant 0 : index
    %1 = vector.load %arg2[%c0_1, %c0_2] : memref<256x128xf32, #tpu.memory_space<vmem>>, vector<256x128xf32>
    %cst = arith.constant dense<0.000000e+00> : vector<2x128xf32>
    %2 = tpu.matmul %0, %1, %cst {dimension_numbers = #tpu.dot_dimension_numbers<[1], [0], [0], [1], [0, 0, 1, 1], [], []>} : vector<2x256xf32>, vector<256x128xf32>, vector<2x128xf32> -> vector<2x128xf32>
    %c0_3 = arith.constant 0 : index
    %c0_4 = arith.constant 0 : index
    %3 = vector.load %arg3[%c0_3, %c0_4] : memref<1x128xf32, #tpu.memory_space<vmem>>, vector<1x128xf32>
    %4 = vector.broadcast %3 : vector<1x128xf32> to vector<2x128xf32>
    %5 = arith.addf %2, %4 : vector<2x128xf32>
    %cst_5 = arith.constant 0.000000e+00 : f32
    %6 = vector.broadcast %cst_5 : f32 to vector<2x128xf32>
    %7 = arith.maximumf %5, %6 : vector<2x128xf32>
    %c0_6 = arith.constant 0 : index
    %c0_7 = arith.constant 0 : index
    %8 = vector.load %arg4[%c0_6, %c0_7] : memref<128x64xf32, #tpu.memory_space<vmem>>, vector<128x64xf32>
    %cst_8 = arith.constant dense<0.000000e+00> : vector<2x64xf32>
    %9 = tpu.matmul %7, %8, %cst_8 {dimension_numbers = #tpu.dot_dimension_numbers<[1], [0], [0], [1], [0, 0, 1, 1], [], []>} : vector<2x128xf32>, vector<128x64xf32>, vector<2x64xf32> -> vector<2x64xf32>
    %c0_9 = arith.constant 0 : index
    %c0_10 = arith.constant 0 : index
    %10 = vector.load %arg5[%c0_9, %c0_10] : memref<1x64xf32, #tpu.memory_space<vmem>>, vector<1x64xf32>
    %11 = vector.broadcast %10 : vector<1x64xf32> to vector<2x64xf32>
    %12 = arith.addf %9, %11 : vector<2x64xf32>
    %cst_11 = arith.constant 0.000000e+00 : f32
    %13 = vector.broadcast %cst_11 : f32 to vector<2x64xf32>
    %14 = arith.maximumf %12, %13 : vector<2x64xf32>
    %c0_12 = arith.constant 0 : index
    %c0_13 = arith.constant 0 : index
    %15 = vector.load %arg6[%c0_12, %c0_13] : memref<64x128xf32, #tpu.memory_space<vmem>>, vector<64x128xf32>
    %cst_14 = arith.constant dense<0.000000e+00> : vector<2x128xf32>
    %16 = tpu.matmul %14, %15, %cst_14 {dimension_numbers = #tpu.dot_dimension_numbers<[1], [0], [0], [1], [0, 0, 1, 1], [], []>} : vector<2x64xf32>, vector<64x128xf32>, vector<2x128xf32> -> vector<2x128xf32>
    %c0_15 = arith.constant 0 : index
    %c0_16 = arith.constant 0 : index
    %17 = vector.load %arg7[%c0_15, %c0_16] : memref<1x128xf32, #tpu.memory_space<vmem>>, vector<1x128xf32>
    %18 = vector.broadcast %17 : vector<1x128xf32> to vector<2x128xf32>
    %19 = arith.addf %16, %18 : vector<2x128xf32>
    %cst_17 = arith.constant 0.000000e+00 : f32
    %20 = vector.broadcast %cst_17 : f32 to vector<2x128xf32>
    %21 = arith.maximumf %19, %20 : vector<2x128xf32>
    %c0_18 = arith.constant 0 : index
    %c0_19 = arith.constant 0 : index
    %22 = vector.load %arg8[%c0_18, %c0_19] : memref<128x256xf32, #tpu.memory_space<vmem>>, vector<128x256xf32>
    %cst_20 = arith.constant dense<0.000000e+00> : vector<2x256xf32>
    %23 = tpu.matmul %21, %22, %cst_20 {dimension_numbers = #tpu.dot_dimension_numbers<[1], [0], [0], [1], [0, 0, 1, 1], [], []>} : vector<2x128xf32>, vector<128x256xf32>, vector<2x256xf32> -> vector<2x256xf32>
    %c0_21 = arith.constant 0 : index
    %c0_22 = arith.constant 0 : index
    %24 = vector.load %arg9[%c0_21, %c0_22] : memref<1x256xf32, #tpu.memory_space<vmem>>, vector<1x256xf32>
    %25 = vector.broadcast %24 : vector<1x256xf32> to vector<2x256xf32>
    %26 = arith.addf %23, %25 : vector<2x256xf32>
    %cst_23 = arith.constant 0.000000e+00 : f32
    %27 = vector.broadcast %cst_23 : f32 to vector<2x256xf32>
    %28 = arith.maximumf %26, %27 : vector<2x256xf32>
    %29 = math.tanh %28 : vector<2x256xf32>
    %c0_24 = arith.constant 0 : index
    %c0_25 = arith.constant 0 : index
    %30 = vector.load %arg10[%c0_24, %c0_25] : memref<2x256xf32, #tpu.memory_space<vmem>>, vector<2x256xf32>
    tpu.vector_store %arg10[%c0_24, %c0_25], %29 {strides = array<i32>} : memref<2x256xf32, #tpu.memory_space<vmem>>, vector<2x256xf32>,
    return
  }
  func.func @transform_0(%arg0: i32) -> (i32, i32) {
    %c0_i32 = arith.constant 0 : i32
    %c0_i32_0 = arith.constant 0 : i32
    return %arg0, %c0_i32 : i32, i32
  }
  func.func @transform_1(%arg0: i32) -> (i32, i32) {
    %c0_i32 = arith.constant 0 : i32
    %c0_i32_0 = arith.constant 0 : i32
    %c0_i32_1 = arith.constant 0 : i32
    return %c0_i32, %c0_i32_0 : i32, i32
  }
  func.func @transform_2(%arg0: i32) -> (i32, i32) {
    %c0_i32 = arith.constant 0 : i32
    %c0_i32_0 = arith.constant 0 : i32
    %c0_i32_1 = arith.constant 0 : i32
    return %c0_i32, %c0_i32_0 : i32, i32
  }
  func.func @transform_3(%arg0: i32) -> (i32, i32) {
    %c0_i32 = arith.constant 0 : i32
    %c0_i32_0 = arith.constant 0 : i32
    %c0_i32_1 = arith.constant 0 : i32
    return %c0_i32, %c0_i32_0 : i32, i32
  }
  func.func @transform_4(%arg0: i32) -> (i32, i32) {
    %c0_i32 = arith.constant 0 : i32
    %c0_i32_0 = arith.constant 0 : i32
    %c0_i32_1 = arith.constant 0 : i32
    return %c0_i32, %c0_i32_0 : i32, i32
  }
  func.func @transform_5(%arg0: i32) -> (i32, i32) {
    %c0_i32 = arith.constant 0 : i32
    %c0_i32_0 = arith.constant 0 : i32
    %c0_i32_1 = arith.constant 0 : i32
    return %c0_i32, %c0_i32_0 : i32, i32
  }
  func.func @transform_6(%arg0: i32) -> (i32, i32) {
    %c0_i32 = arith.constant 0 : i32
    %c0_i32_0 = arith.constant 0 : i32
    %c0_i32_1 = arith.constant 0 : i32
    return %c0_i32, %c0_i32_0 : i32, i32
  }
  func.func @transform_7(%arg0: i32) -> (i32, i32) {
    %c0_i32 = arith.constant 0 : i32
    %c0_i32_0 = arith.constant 0 : i32
    %c0_i32_1 = arith.constant 0 : i32
    return %c0_i32, %c0_i32_0 : i32, i32
  }
  func.func @transform_8(%arg0: i32) -> (i32, i32) {
    %c0_i32 = arith.constant 0 : i32
    %c0_i32_0 = arith.constant 0 : i32
    %c0_i32_1 = arith.constant 0 : i32
    return %c0_i32, %c0_i32_0 : i32, i32
  }
  func.func @transform_9(%arg0: i32) -> (i32, i32) {
    %c0_i32 = arith.constant 0 : i32
    %c0_i32_0 = arith.constant 0 : i32
    return %arg0, %c0_i32 : i32, i32
  }
}

</mosaic_0001>

<llo_original>
// kernel: caep23l2_forward.1
$region0: #{caep23l2_forward.1}
  #allocation0 [shape = 'u32[]', space=smem, size = 0x4, offset = 0x4, fixed_abs, tag = 'smem constant byte address 0x4 - core index']
  #allocation1 [shape = 'u32[144,128]{1,0:T(1,128)}', space=vmem, size = 0x12000, scoped, tag = 'internal scratch']
  %s0 = inlined_call_operand.vmem [shape: f32[2,256], index: 0, kind: input, shape index: {}]
  %s1 = inlined_call_operand.hbm [shape: f32[256,128], index: 1, kind: input, shape index: {}]
  %s2 = inlined_call_operand.vmem [shape: f32[1,128], index: 2, kind: input, shape index: {}]
  %s3 = inlined_call_operand.vmem [shape: f32[128,64], index: 3, kind: input, shape index: {}]
  %s4 = inlined_call_operand.vmem [shape: f32[1,64], index: 4, kind: input, shape index: {}]
  %s5 = inlined_call_operand.vmem [shape: f32[64,128], index: 5, kind: input, shape index: {}]
  %s6 = inlined_call_operand.vmem [shape: f32[1,128], index: 6, kind: input, shape index: {}]
  %s7 = inlined_call_operand.hbm [shape: f32[128,256], index: 7, kind: input, shape index: {}]
  %s8 = inlined_call_operand.vmem [shape: f32[1,256], index: 8, kind: input, shape index: {}]
  %s9 = inlined_call_operand.vmem [shape: f32[2,256], index: 9, kind: output, shape index: {}]
  %s10 = sld [smem:[#allocation0]]
  $region54: #{caep23l2_forward.1} parent=0
    _
  %s12 = ssub.s32 1, %s10
  %s13 = scalar_select 0, %s12, %s10
  $region1: #{caep23l2_forward.1} parent=0
    #allocation2 [shape = 'u8[131072]{0}', space=vmem, size = 0x20000, scoped, tag = 'input window, operand 1, single buffered']
    #allocation3 [shape = 's32[1]{0}', space=sflag, size = 0x4, scoped, tag = 'scoped memory for caep23l2_forward.1']
    #allocation4 [shape = 'u8[131072]{0}', space=vmem, size = 0x20000, scoped, tag = 'input window, operand 7, single buffered']
    #allocation5 [shape = 's32[1]{0}', space=sflag, size = 0x4, scoped, tag = 'scoped memory for caep23l2_forward.1']
    %14 = vsyncpa [#allocation3], 0
    %15 = vsyncpa [#allocation5], 0
    // Predicated region
    $region2: #{caep23l2_forward.1} parent=1 // pred_check
      _
    $region3: #{caep23l2_forward.1} parent=1 // pred_check_branch
      %17 = sbr.rel (0) target = $region5
    $region4: #{caep23l2_forward.1} parent=1 // pred_region
      _
    $region5: #{caep23l2_forward.1} parent=1 // pred_fallthru
      _
    // Predicated region
    $region6: #{caep23l2_forward.1} parent=1 // pred_check
      _
    $region7: #{caep23l2_forward.1} parent=1 // pred_check_branch
      %19 = sbr.rel (0) target = $region9
    $region8: #{caep23l2_forward.1} parent=1 // pred_region
      %s21 = ssub.s32 4096, 4096
      %22 = vsyncadd [#allocation3], %s21
      %s23 = sshll.u32 [#allocation2], 4
      %s24 = int_to_ptr.vmem [resolvable:$true] %s23
      %29 = dma.hbm_to_vmem [thread:$0]  %s1, 4096, %s24, [#allocation3], 128, 128, 8
    $region9: #{caep23l2_forward.1} parent=1 // pred_fallthru
      _
    // Predicated region
    $region10: #{caep23l2_forward.1} parent=1 // pred_check
      _
    $region11: #{caep23l2_forward.1} parent=1 // pred_check_branch
      %31 = sbr.rel (0) target = $region13
    $region12: #{caep23l2_forward.1} parent=1 // pred_region
      _
    $region13: #{caep23l2_forward.1} parent=1 // pred_fallthru
      _
    // Predicated region
    $region14: #{caep23l2_forward.1} parent=1 // pred_check
      _
    $region15: #{caep23l2_forward.1} parent=1 // pred_check_branch
      %33 = sbr.rel (0) target = $region17
    $region16: #{caep23l2_forward.1} parent=1 // pred_region
      _
    $region17: #{caep23l2_forward.1} parent=1 // pred_fallthru
      _
    // Predicated region
    $region18: #{caep23l2_forward.1} parent=1 // pred_check
      _
    $region19: #{caep23l2_forward.1} parent=1 // pred_check_branch
      %35 = sbr.rel (0) target = $region21
    $region20: #{caep23l2_forward.1} parent=1 // pred_region
      _
    $region21: #{caep23l2_forward.1} parent=1 // pred_fallthru
      _
    // Predicated region
    $region22: #{caep23l2_forward.1} parent=1 // pred_check
      _
    $region23: #{caep23l2_forward.1} parent=1 // pred_check_branch
      %37 = sbr.rel (0) target = $region25
    $region24: #{caep23l2_forward.1} parent=1 // pred_region
      _
    $region25: #{caep23l2_forward.1} parent=1 // pred_fallthru
      _
    // Predicated region
    $region26: #{caep23l2_forward.1} parent=1 // pred_check
      _
    $region27: #{caep23l2_forward.1} parent=1 // pred_check_branch
      %39 = sbr.rel (0) target = $region29
    $region28: #{caep23l2_forward.1} parent=1 // pred_region
      _
    $region29: #{caep23l2_forward.1} parent=1 // pred_fallthru
      _
    // Predicated region
    $region30: #{caep23l2_forward.1} parent=1 // pred_check
      _
    $region31: #{caep23l2_forward.1} parent=1 // pred_check_branch
      %41 = sbr.rel (0) target = $region33
    $region32: #{caep23l2_forward.1} parent=1 // pred_region
      %s43 = ssub.s32 4096, 4096
      %44 = vsyncadd [#allocation5], %s43
      %s45 = sshll.u32 [#allocation4], 4
      %s46 = int_to_ptr.vmem [resolvable:$true] %s45
      %51 = dma.hbm_to_vmem [thread:$0]  %s7, 4096, %s46, [#allocation5], 256, 256, 16
    $region33: #{caep23l2_forward.1} parent=1 // pred_fallthru
      _
    // Predicated region
    $region34: #{caep23l2_forward.1} parent=1 // pred_check
      _
    $region35: #{caep23l2_forward.1} parent=1 // pred_check_branch
      %53 = sbr.rel (0) target = $region37
    $region36: #{caep23l2_forward.1} parent=1 // pred_region
      _
    $region37: #{caep23l2_forward.1} parent=1 // pred_fallthru
      _
    // Predicated region
    $region38: #{caep23l2_forward.1} parent=1 // pred_check
      _
    $region39: #{caep23l2_forward.1} parent=1 // pred_check_branch
      %55 = sbr.rel (0) target = $region41
    $region40: #{caep23l2_forward.1} parent=1 // pred_region
      %56 = dma.done [#allocation3], 4096
    $region41: #{caep23l2_forward.1} parent=1 // pred_fallthru
      _
    // Predicated region
    $region42: #{caep23l2_forward.1} parent=1 // pred_check
      _
    $region43: #{caep23l2_forward.1} parent=1 // pred_check_branch
      %58 = sbr.rel (0) target = $region45
    $region44: #{caep23l2_forward.1} parent=1 // pred_region
      %59 = dma.done [#allocation5], 4096
    $region45: #{caep23l2_forward.1} parent=1 // pred_fallthru
      _
    %v60 = vld [vmem:[%s0] sm:$0xf]
    %v61 = vld [vmem:[#allocation2] sm:$0xff]
    %v62 = vld [vmem:[#allocation2 + $0x8] sm:$0xff]
    %v63 = vld [vmem:[#allocation2 + $0x10] sm:$0xff]
    %v64 = vld [vmem:[#allocation2 + $0x18] sm:$0xff]
    %v65 = vld [vmem:[#allocation2 + $0x20] sm:$0xff]
    %v66 = vld [vmem:[#allocation2 + $0x28] sm:$0xff]
    %v67 = vld [vmem:[#allocation2 + $0x30] sm:$0xff]
    %v68 = vld [vmem:[#allocation2 + $0x38] sm:$0xff]
    %v69 = vld [vmem:[#allocation2 + $0x40] sm:$0xff]
    %v70 = vld [vmem:[#allocation2 + $0x48] sm:$0xff]
    %v71 = vld [vmem:[#allocation2 + $0x50] sm:$0xff]
    %v72 = vld [vmem:[#allocation2 + $0x58] sm:$0xff]
    %v73 = vld [vmem:[#allocation2 + $0x60] sm:$0xff]
    %v74 = vld [vmem:[#allocation2 + $0x68] sm:$0xff]
    %v75 = vld [vmem:[#allocation2 + $0x70] sm:$0xff]
    %v76 = vld [vmem:[#allocation2 + $0x78] sm:$0xff]
    %v77 = vld [vmem:[#allocation2 + $0x80] sm:$0xff]
    %v78 = vld [vmem:[#allocation2 + $0x88] sm:$0xff]
    %v79 = vld [vmem:[#allocation2 + $0x90] sm:$0xff]
    %v80 = vld [vmem:[#allocation2 + $0x98] sm:$0xff]
    %v81 = vld [vmem:[#allocation2 + $0xa0] sm:$0xff]
    %v82 = vld [vmem:[#allocation2 + $0xa8] sm:$0xff]
    %v83 = vld [vmem:[#allocation2 + $0xb0] sm:$0xff]
    %v84 = vld [vmem:[#allocation2 + $0xb8] sm:$0xff]
    %v85 = vld [vmem:[#allocation2 + $0xc0] sm:$0xff]
    %v86 = vld [vmem:[#allocation2 + $0xc8] sm:$0xff]
    %v87 = vld [vmem:[#allocation2 + $0xd0] sm:$0xff]
    %v88 = vld [vmem:[#allocation2 + $0xd8] sm:$0xff]
    %v89 = vld [vmem:[#allocation2 + $0xe0] sm:$0xff]
    %v90 = vld [vmem:[#allocation2 + $0xe8] sm:$0xff]
    %v91 = vld [vmem:[#allocation2 + $0xf0] sm:$0xff]
    %v92 = vld [vmem:[#allocation2 + $0xf8] sm:$0xff]
    %v93 = vld [vmem:[%s2] sm:$0x1]
    %v95 = vlaneseq
    %v96 = vshrl.u32 %v95, 7
    %v97 = vsub.s32 0, %v96
    %v98 = vrot.slane %v93, %v97
    %v102 = vunpack.c.l.s4 1983009808
    %v103 = vunpack.c.0.s8 %v102
    %v104 = vlaneseq
    %v105 = vshrl.u32 %v104, 7
    %v106 = vsub.s32 %v103, %v105
    %v107 = vrot.slane %v60, %v106
    %v108 = vcombine.high %v107, %v107
    %111 = vmatprep.subr.mxu0 0.0
    %112 = vmatpush1.msra.mxu0 %v61
    %113 = vmatprep.subr.mxu0 0.0
    %114 = vmatpush1.msra.mxu0 %v62
    %115 = vmatprep.subr.mxu0 0.0
    %116 = vmatpush1.msra.mxu0 %v63
    %117 = vmatprep.subr.mxu0 0.0
    %118 = vmatpush1.msra.mxu0 %v64
    %119 = vmatprep.subr.mxu0 0.0
    %120 = vmatpush1.msra.mxu0 %v65
    %121 = vmatprep.subr.mxu0 0.0
    %122 = vmatpush1.msra.mxu0 %v66
    %123 = vmatprep.subr.mxu0 0.0
    %124 = vmatpush1.msra.mxu0 %v67
    %125 = vmatprep.subr.mxu0 0.0
    %126 = vmatpush1.msra.mxu0 %v68
    %127 = vmatprep.subr.mxu0 0.0
    %128 = vmatpush1.msra.mxu0 %v69
    %129 = vmatprep.subr.mxu0 0.0
    %130 = vmatpush1.msra.mxu0 %v70
    %131 = vmatprep.subr.mxu0 0.0
    %132 = vmatpush1.msra.mxu0 %v71
    %133 = vmatprep.subr.mxu0 0.0
    %134 = vmatpush1.msra.mxu0 %v72
    %135 = vmatprep.subr.mxu0 0.0
    %136 = vmatpush1.msra.mxu0 %v73
    %137 = vmatprep.subr.mxu0 0.0
    %138 = vmatpush1.msra.mxu0 %v74
    %139 = vmatprep.subr.mxu0 0.0
    %140 = vmatpush1.msra.mxu0 %v75
    %141 = vmatprep.subr.mxu0 0.0
    %142 = vmatpush1.msra.mxu0 %v76
    %143 = vmatprep.subr.mxu0 0.0
    %144 = vmatpush1.msra.mxu0 %v77
    %145 = vmatprep.subr.mxu0 0.0
    %146 = vmatpush1.msra.mxu0 %v78
    %147 = vmatprep.subr.mxu0 0.0
    %148 = vmatpush1.msra.mxu0 %v79
    %149 = vmatprep.subr.mxu0 0.0
    %150 = vmatpush1.msra.mxu0 %v80
    %151 = vmatprep.subr.mxu0 0.0
    %152 = vmatpush1.msra.mxu0 %v81
    %153 = vmatprep.subr.mxu0 0.0
    %154 = vmatpush1.msra.mxu0 %v82
    %155 = vmatprep.subr.mxu0 0.0
    %156 = vmatpush1.msra.mxu0 %v83
    %157 = vmatprep.subr.mxu0 0.0
    %158 = vmatpush1.msra.mxu0 %v84
    %159 = vmatprep.subr.mxu0 0.0
    %160 = vmatpush1.msra.mxu0 %v85
    %161 = vmatprep.subr.mxu0 0.0
    %162 = vmatpush1.msra.mxu0 %v86
    %163 = vmatprep.subr.mxu0 0.0
    %164 = vmatpush1.msra.mxu0 %v87
    %165 = vmatprep.subr.mxu0 0.0
    %166 = vmatpush1.msra.mxu0 %v88
    %167 = vmatprep.subr.mxu0 0.0
    %168 = vmatpush1.msra.mxu0 %v89
    %169 = vmatprep.subr.mxu0 0.0
    %170 = vmatpush1.msra.mxu0 %v90
    %171 = vmatprep.subr.mxu0 0.0
    %172 = vmatpush1.msra.mxu0 %v91
    %173 = vmatprep.subr.mxu0 0.0
    %174 = vmatpush1.msra.mxu0 %v92
    %175 = vmatprep.mubr.f32.mxu0 %v108
    %176 = vmatmul.mubr.f32.gmra.mrb[0].mxu0 %v107
    %v177 = vpop.f32.mrb[0].mxu0
    %v178 = vadd.f32 %v98, %v177
    %v179 = vpop.f32.mrb[0].mxu0
    %180 = vdwg.mxu0
    %v181 = vmax.f32 %v178, 0.0
    %v182 = vld [vmem:[%s3] sm:$0xff]
    %v183 = vld [vmem:[%s3 + $0x8] sm:$0xff]
    %v184 = vld [vmem:[%s3 + $0x10] sm:$0xff]
    %v185 = vld [vmem:[%s3 + $0x18] sm:$0xff]
    %v186 = vld [vmem:[%s3 + $0x20] sm:$0xff]
    %v187 = vld [vmem:[%s3 + $0x28] sm:$0xff]
    %v188 = vld [vmem:[%s3 + $0x30] sm:$0xff]
    %v189 = vld [vmem:[%s3 + $0x38] sm:$0xff]
    %v190 = vld [vmem:[%s3 + $0x40] sm:$0xff]
    %v191 = vld [vmem:[%s3 + $0x48] sm:$0xff]
    %v192 = vld [vmem:[%s3 + $0x50] sm:$0xff]
    %v193 = vld [vmem:[%s3 + $0x58] sm:$0xff]
    %v194 = vld [vmem:[%s3 + $0x60] sm:$0xff]
    %v195 = vld [vmem:[%s3 + $0x68] sm:$0xff]
    %v196 = vld [vmem:[%s3 + $0x70] sm:$0xff]
    %v197 = vld [vmem:[%s3 + $0x78] sm:$0xff]
    %v198 = vld [vmem:[%s4] sm:$0x1]
    %v200 = vlaneseq
    %v201 = vshrl.u32 %v200, 7
    %v202 = vsub.s32 0, %v201
    %v203 = vrot.slane %v198, %v202
    %205 = vmatprep.subr.mxu0 0.0
    %206 = vmatpush1.msra.mxu0 %v182
    %207 = vmatprep.subr.mxu0 0.0
    %208 = vmatpush1.msra.mxu0 %v183
    %209 = vmatprep.subr.mxu0 0.0
    %210 = vmatpush1.msra.mxu0 %v184
    %211 = vmatprep.subr.mxu0 0.0
    %212 = vmatpush1.msra.mxu0 %v185
    %213 = vmatprep.subr.mxu0 0.0
    %214 = vmatpush1.msra.mxu0 %v186
    %215 = vmatprep.subr.mxu0 0.0
    %216 = vmatpush1.msra.mxu0 %v187
    %217 = vmatprep.subr.mxu0 0.0
    %218 = vmatpush1.msra.mxu0 %v188
    %219 = vmatprep.subr.mxu0 0.0
    %220 = vmatpush1.msra.mxu0 %v189
    %221 = vmatprep.subr.mxu0 0.0
    %222 = vmatpush1.msra.mxu0 %v190
    %223 = vmatprep.subr.mxu0 0.0
    %224 = vmatpush1.msra.mxu0 %v191
    %225 = vmatprep.subr.mxu0 0.0
    %226 = vmatpush1.msra.mxu0 %v192
    %227 = vmatprep.subr.mxu0 0.0
    %228 = vmatpush1.msra.mxu0 %v193
    %229 = vmatprep.subr.mxu0 0.0
    %230 = vmatpush1.msra.mxu0 %v194
    %231 = vmatprep.subr.mxu0 0.0
    %232 = vmatpush1.msra.mxu0 %v195
    %233 = vmatprep.subr.mxu0 0.0
    %234 = vmatpush1.msra.mxu0 %v196
    %235 = vmatprep.subr.mxu0 0.0
    %236 = vmatpush1.msra.mxu0 %v197
    %237 = vmatprep.subr.mxu0 0.0
    %238 = vmatpush1.msra.mxu0 0.0
    %239 = vmatprep.subr.mxu0 0.0
    %240 = vmatpush1.msra.mxu0 0.0
    %241 = vmatprep.subr.mxu0 0.0
    %242 = vmatpush1.msra.mxu0 0.0
    %243 = vmatprep.subr.mxu0 0.0
    %244 = vmatpush1.msra.mxu0 0.0
    %245 = vmatprep.subr.mxu0 0.0
    %246 = vmatpush1.msra.mxu0 0.0
    %247 = vmatprep.subr.mxu0 0.0
    %248 = vmatpush1.msra.mxu0 0.0
    %249 = vmatprep.subr.mxu0 0.0
    %250 = vmatpush1.msra.mxu0 0.0
    %251 = vmatprep.subr.mxu0 0.0
    %252 = vmatpush1.msra.mxu0 0.0
    %253 = vmatprep.subr.mxu0 0.0
    %254 = vmatpush1.msra.mxu0 0.0
    %255 = vmatprep.subr.mxu0 0.0
    %256 = vmatpush1.msra.mxu0 0.0
    %257 = vmatprep.subr.mxu0 0.0
    %258 = vmatpush1.msra.mxu0 0.0
    %259 = vmatprep.subr.mxu0 0.0
    %260 = vmatpush1.msra.mxu0 0.0
    %261 = vmatprep.subr.mxu0 0.0
    %262 = vmatpush1.msra.mxu0 0.0
    %263 = vmatprep.subr.mxu0 0.0
    %264 = vmatpush1.msra.mxu0 0.0
    %265 = vmatprep.subr.mxu0 0.0
    %266 = vmatpush1.msra.mxu0 0.0
    %267 = vmatprep.subr.mxu0 0.0
    %268 = vmatpush1.msra.mxu0 0.0
    %269 = vmatprep.mubr.f32.mxu0 0.0
    %270 = vmatmul.mubr.f32.gmra.mrb[0].mxu0 %v181
    %v271 = vpop.f32.mrb[0].mxu0
    %v272 = vadd.f32 %v203, %v271
    %v273 = vpop.f32.mrb[0].mxu0
    %274 = vdwg.mxu0
    %v275 = vmax.f32 %v272, 0.0
    %v276 = vld [vmem:[%s5] sm:$0xff]
    %v277 = vld [vmem:[%s5 + $0x8] sm:$0xff]
    %v278 = vld [vmem:[%s5 + $0x10] sm:$0xff]
    %v279 = vld [vmem:[%s5 + $0x18] sm:$0xff]
    %v280 = vld [vmem:[%s5 + $0x20] sm:$0xff]
    %v281 = vld [vmem:[%s5 + $0x28] sm:$0xff]
    %v282 = vld [vmem:[%s5 + $0x30] sm:$0xff]
    %v283 = vld [vmem:[%s5 + $0x38] sm:$0xff]
    %v284 = vld [vmem:[%s6] sm:$0x1]
    %v286 = vlaneseq
    %v287 = vshrl.u32 %v286, 7
    %v288 = vsub.s32 0, %v287
    %v289 = vrot.slane %v284, %v288
    %vm291 = vcmask 523264
    %v293 = vsel %vm291, %v275, 0
    %295 = vmatprep.subr.mxu0 0.0
    %296 = vmatpush1.msra.mxu0 %v276
    %297 = vmatprep.subr.mxu0 0.0
    %298 = vmatpush1.msra.mxu0 %v277
    %299 = vmatprep.subr.mxu0 0.0
    %300 = vmatpush1.msra.mxu0 %v278
    %301 = vmatprep.subr.mxu0 0.0
    %302 = vmatpush1.msra.mxu0 %v279
    %303 = vmatprep.subr.mxu0 0.0
    %304 = vmatpush1.msra.mxu0 %v280
    %305 = vmatprep.subr.mxu0 0.0
    %306 = vmatpush1.msra.mxu0 %v281
    %307 = vmatprep.subr.mxu0 0.0
    %308 = vmatpush1.msra.mxu0 %v282
    %309 = vmatprep.subr.mxu0 0.0
    %310 = vmatpush1.msra.mxu0 %v283
    %311 = vmatprep.subr.mxu0 0.0
    %312 = vmatpush1.msra.mxu0 0.0
    %313 = vmatprep.subr.mxu0 0.0
    %314 = vmatpush1.msra.mxu0 0.0
    %315 = vmatprep.subr.mxu0 0.0
    %316 = vmatpush1.msra.mxu0 0.0
    %317 = vmatprep.subr.mxu0 0.0
    %318 = vmatpush1.msra.mxu0 0.0
    %319 = vmatprep.subr.mxu0 0.0
    %320 = vmatpush1.msra.mxu0 0.0
    %321 = vmatprep.subr.mxu0 0.0
    %322 = vmatpush1.msra.mxu0 0.0
    %323 = vmatprep.subr.mxu0 0.0
    %324 = vmatpush1.msra.mxu0 0.0
    %325 = vmatprep.subr.mxu0 0.0
    %326 = vmatpush1.msra.mxu0 0.0
    %327 = vmatprep.subr.mxu0 0.0
    %328 = vmatpush1.msra.mxu0 0.0
    %329 = vmatprep.subr.mxu0 0.0
    %330 = vmatpush1.msra.mxu0 0.0
    %331 = vmatprep.subr.mxu0 0.0
    %332 = vmatpush1.msra.mxu0 0.0
    %333 = vmatprep.subr.mxu0 0.0
    %334 = vmatpush1.msra.mxu0 0.0
    %335 = vmatprep.subr.mxu0 0.0
    %336 = vmatpush1.msra.mxu0 0.0
    %337 = vmatprep.subr.mxu0 0.0
    %338 = vmatpush1.msra.mxu0 0.0
    %339 = vmatprep.subr.mxu0 0.0
    %340 = vmatpush1.msra.mxu0 0.0
    %341 = vmatprep.subr.mxu0 0.0
    %342 = vmatpush1.msra.mxu0 0.0
    %343 = vmatprep.subr.mxu0 0.0
    %344 = vmatpush1.msra.mxu0 0.0
    %345 = vmatprep.subr.mxu0 0.0
    %346 = vmatpush1.msra.mxu0 0.0
    %347 = vmatprep.subr.mxu0 0.0
    %348 = vmatpush1.msra.mxu0 0.0
    %349 = vmatprep.subr.mxu0 0.0
    %350 = vmatpush1.msra.mxu0 0.0
    %351 = vmatprep.subr.mxu0 0.0
    %352 = vmatpush1.msra.mxu0 0.0
    %353 = vmatprep.subr.mxu0 0.0
    %354 = vmatpush1.msra.mxu0 0.0
    %355 = vmatprep.subr.mxu0 0.0
    %356 = vmatpush1.msra.mxu0 0.0
    %357 = vmatprep.subr.mxu0 0.0
    %358 = vmatpush1.msra.mxu0 0.0
    %359 = vmatprep.mubr.f32.mxu0 0.0
    %360 = vmatmul.mubr.f32.gmra.mrb[0].mxu0 %v293
    %v361 = vpop.f32.mrb[0].mxu0
    %v362 = vadd.f32 %v289, %v361
    %v363 = vpop.f32.mrb[0].mxu0
    %364 = vdwg.mxu0
    %v365 = vmax.f32 %v362, 0.0
    %v366 = vld [vmem:[#allocation4] sm:$0xff]
    %v367 = vld [vmem:[#allocation4 + $0x8] sm:$0xff]
    %v368 = vld [vmem:[#allocation4 + $0x10] sm:$0xff]
    %v369 = vld [vmem:[#allocation4 + $0x18] sm:$0xff]
    %v370 = vld [vmem:[#allocation4 + $0x20] sm:$0xff]
    %v371 = vld [vmem:[#allocation4 + $0x28] sm:$0xff]
    %v372 = vld [vmem:[#allocation4 + $0x30] sm:$0xff]
    %v373 = vld [vmem:[#allocation4 + $0x38] sm:$0xff]
    %v374 = vld [vmem:[#allocation4 + $0x40] sm:$0xff]
    %v375 = vld [vmem:[#allocation4 + $0x48] sm:$0xff]
    %v376 = vld [vmem:[#allocation4 + $0x50] sm:$0xff]
    %v377 = vld [vmem:[#allocation4 + $0x58] sm:$0xff]
    %v378 = vld [vmem:[#allocation4 + $0x60] sm:$0xff]
    %v379 = vld [vmem:[#allocation4 + $0x68] sm:$0xff]
    %v380 = vld [vmem:[#allocation4 + $0x70] sm:$0xff]
    %v381 = vld [vmem:[#allocation4 + $0x78] sm:$0xff]
    %v382 = vld [vmem:[#allocation4 + $0x80] sm:$0xff]
    %v383 = vld [vmem:[#allocation4 + $0x88] sm:$0xff]
    %v384 = vld [vmem:[#allocation4 + $0x90] sm:$0xff]
    %v385 = vld [vmem:[#allocation4 + $0x98] sm:$0xff]
    %v386 = vld [vmem:[#allocation4 + $0xa0] sm:$0xff]
    %v387 = vld [vmem:[#allocation4 + $0xa8] sm:$0xff]
    %v388 = vld [vmem:[#allocation4 + $0xb0] sm:$0xff]
    %v389 = vld [vmem:[#allocation4 + $0xb8] sm:$0xff]
    %v390 = vld [vmem:[#allocation4 + $0xc0] sm:$0xff]
    %v391 = vld [vmem:[#allocation4 + $0xc8] sm:$0xff]
    %v392 = vld [vmem:[#allocation4 + $0xd0] sm:$0xff]
    %v393 = vld [vmem:[#allocation4 + $0xd8] sm:$0xff]
    %v394 = vld [vmem:[#allocation4 + $0xe0] sm:$0xff]
    %v395 = vld [vmem:[#allocation4 + $0xe8] sm:$0xff]
    %v396 = vld [vmem:[#allocation4 + $0xf0] sm:$0xff]
    %v397 = vld [vmem:[#allocation4 + $0xf8] sm:$0xff]
    %v398 = vld [vmem:[%s8] sm:$0x3]
    %v400 = vlaneseq
    %v401 = vshrl.u32 %v400, 7
    %v402 = vsub.s32 0, %v401
    %v403 = vrot.slane %v398, %v402
    %v404 = vlaneseq
    %v405 = vshrl.u32 %v404, 7
    %v406 = vsub.s32 1, %v405
    %v407 = vrot.slane %v398, %v406
    %410 = vmatprep.subr.mxu0 %v367
    %411 = vmatpush1.msra.mxu0 %v366
    %412 = vmatprep.subr.mxu0 %v369
    %413 = vmatpush1.msra.mxu0 %v368
    %414 = vmatprep.subr.mxu0 %v371
    %415 = vmatpush1.msra.mxu0 %v370
    %416 = vmatprep.subr.mxu0 %v373
    %417 = vmatpush1.msra.mxu0 %v372
    %418 = vmatprep.subr.mxu0 %v375
    %419 = vmatpush1.msra.mxu0 %v374
    %420 = vmatprep.subr.mxu0 %v377
    %421 = vmatpush1.msra.mxu0 %v376
    %422 = vmatprep.subr.mxu0 %v379
    %423 = vmatpush1.msra.mxu0 %v378
    %424 = vmatprep.subr.mxu0 %v381
    %425 = vmatpush1.msra.mxu0 %v380
    %426 = vmatprep.subr.mxu0 %v383
    %427 = vmatpush1.msra.mxu0 %v382
    %428 = vmatprep.subr.mxu0 %v385
    %429 = vmatpush1.msra.mxu0 %v384
    %430 = vmatprep.subr.mxu0 %v387
    %431 = vmatpush1.msra.mxu0 %v386
    %432 = vmatprep.subr.mxu0 %v389
    %433 = vmatpush1.msra.mxu0 %v388
    %434 = vmatprep.subr.mxu0 %v391
    %435 = vmatpush1.msra.mxu0 %v390
    %436 = vmatprep.subr.mxu0 %v393
    %437 = vmatpush1.msra.mxu0 %v392
    %438 = vmatprep.subr.mxu0 %v395
    %439 = vmatpush1.msra.mxu0 %v394
    %440 = vmatprep.subr.mxu0 %v397
    %441 = vmatpush1.msra.mxu0 %v396
    %442 = vmatprep.subr.mxu0 0.0
    %443 = vmatpush1.msra.mxu0 0.0
    %444 = vmatprep.subr.mxu0 0.0
    %445 = vmatpush1.msra.mxu0 0.0
    %446 = vmatprep.subr.mxu0 0.0
    %447 = vmatpush1.msra.mxu0 0.0
    %448 = vmatprep.subr.mxu0 0.0
    %449 = vmatpush1.msra.mxu0 0.0
    %450 = vmatprep.subr.mxu0 0.0
    %451 = vmatpush1.msra.mxu0 0.0
    %452 = vmatprep.subr.mxu0 0.0
    %453 = vmatpush1.msra.mxu0 0.0
    %454 = vmatprep.subr.mxu0 0.0
    %455 = vmatpush1.msra.mxu0 0.0
    %456 = vmatprep.subr.mxu0 0.0
    %457 = vmatpush1.msra.mxu0 0.0
    %458 = vmatprep.subr.mxu0 0.0
    %459 = vmatpush1.msra.mxu0 0.0
    %460 = vmatprep.subr.mxu0 0.0
    %461 = vmatpush1.msra.mxu0 0.0
    %462 = vmatprep.subr.mxu0 0.0
    %463 = vmatpush1.msra.mxu0 0.0
    %464 = vmatprep.subr.mxu0 0.0
    %465 = vmatpush1.msra.mxu0 0.0
    %466 = vmatprep.subr.mxu0 0.0
    %467 = vmatpush1.msra.mxu0 0.0
    %468 = vmatprep.subr.mxu0 0.0
    %469 = vmatpush1.msra.mxu0 0.0
    %470 = vmatprep.subr.mxu0 0.0
    %471 = vmatpush1.msra.mxu0 0.0
    %472 = vmatprep.subr.mxu0 0.0
    %473 = vmatpush1.msra.mxu0 0.0
    %474 = vmatprep.mubr.f32.mxu0 0.0
    %475 = vmatmul.mubr.f32.gmra.mrb[0].mxu0 %v365
    %v476 = vpop.f32.mrb[0].mxu0
    %v477 = vadd.f32 %v403, %v476
    %v478 = vpop.f32.mrb[0].mxu0
    %v479 = vadd.f32 %v407, %v478
    %480 = vdwg.mxu0
    %v481 = vmax.f32 %v477, 0.0
    %v482 = vmax.f32 %v479, 0.0
    %v483 = vtanh.pop %v481
    %v484 = vtanh.pop %v482
    %v487 = vcombine.low %v483, %v484
    %v489 = vunpack.c.l.s4 1983009808
    %v490 = vunpack.c.0.s8 %v489
    %v491 = vlaneseq
    %v492 = vshrl.u32 %v491, 7
    %v493 = vsub.s32 %v490, %v492
    %v494 = vrot.slane %v487, %v493
    %496 = vst [vmem:[%s9] sm:$0xf] %v494
    // Predicated region
    $region46: #{caep23l2_forward.1} parent=1 // pred_check
      _
    $region47: #{caep23l2_forward.1} parent=1 // pred_check_branch
      %498 = sbr.rel (0) target = $region49
    $region48: #{caep23l2_forward.1} parent=1 // pred_region
      _
    $region49: #{caep23l2_forward.1} parent=1 // pred_fallthru
      _
    // Predicated region
    $region50: #{caep23l2_forward.1} parent=1 // pred_check
      _
    $region51: #{caep23l2_forward.1} parent=1 // pred_check_branch
      %500 = sbr.rel (0) target = $region53
    $region52: #{caep23l2_forward.1} parent=1 // pred_region
      _
    $region53: #{caep23l2_forward.1} parent=1 // pred_fallthru
      _
    %501 = vsyncpa [#allocation3], 1
    %502 = vsyncpa [#allocation5], 1

</llo_original>
